<compile_context>
chip_gen: v7x
topology: tpu7x:2x2x1
jax: 0.10.0
libtpu: 0.0.40
codegen_flags: <defaults>
</compile_context>

<pallas_src>
import functools

import jax
import jax.numpy as jnp
from jax.experimental import pallas as pl
from jax.experimental.pallas import tpu as pltpu

_LANE = 128
_SUBLANE = 8
_ACC_ROWS = 32                  # accumulator sublanes (4 vregs -> 4-way ILP)
_TARGET_TILE_BYTES = 4 << 20    # ~4 MiB of DMA per input per grid step
_NUM_CORE_SPLITS = 2            # leading "parallel" axis; sequential on 1-TC chips
_VMEM_LIMIT_BYTES = 40 << 20    # pipeline buffers (16 MiB) + headroom, all gens


def _loss_kernel(x_ref, t_ref, out_ref, acc_ref, *,
                 same_sign_weight, diff_sign_weight, inv_count,
                 tiles_per_core, valid_rows, block_rows, acc_rows):
    c = pl.program_id(0)   # core-split axis ("parallel")
    i = pl.program_id(1)   # streaming reduction axis ("arbitrary")

    @pl.when(i == 0)
    def _init():
        acc_ref[...] = jnp.zeros_like(acc_ref)

    # Unclamped start row of the tile this grid step *asked* for.  Clamped
    # duplicate tiles (from the index_map clamp) have row0 >= valid_rows and
    # fall into the masked branch where every contribution is zeroed.
    row0 = (c * tiles_per_core + i) * block_rows

    def accumulate(apply_tail_mask):
        x = x_ref[...].astype(jnp.float32)
        t = t_ref[...].astype(jnp.float32)
        sq_error = (x - t) * (x - t)
        weights = jnp.where((x * t) >= 0.0,
                            jnp.float32(same_sign_weight),
                            jnp.float32(diff_sign_weight))
        contrib = weights * sq_error
        if apply_tail_mask:
            # Lane-dense iota: no (rows,1)->(rows,128) broadcast in the select.
            row_ids = jax.lax.broadcasted_iota(
                jnp.int32, (block_rows, _LANE), 0) + row0
            contrib = jnp.where(row_ids < valid_rows, contrib, 0.0)
        # Sublane-grouped partial reduce: pure vreg-wise VPU adds onto the
        # (acc_rows, 128) accumulator.
        acc_ref[...] += contrib.reshape(
            block_rows // acc_rows, acc_rows, _LANE).sum(axis=0)

    fully_valid = row0 + block_rows <= valid_rows

    @pl.when(fully_valid)                    # hot path: no mask work at all
    def _fast():
        accumulate(apply_tail_mask=False)

    @pl.when(jnp.logical_not(fully_valid))   # tail / clamped duplicate tiles
    def _tail():
        accumulate(apply_tail_mask=True)

    @pl.when(i == pl.num_programs(1) - 1)
    def _finalize():
        out_ref[...] = acc_ref[...] * jnp.float32(inv_count)


def sign_sensitive_mse_loss(inp, target, same_sign_weight=0.5, diff_sign_weight=2.0):
    """Matches torch: mean(where(input*target>=0, ssw, dsw) * (input-target)**2)."""
    assert inp.shape == target.shape
    n = inp.size

    # Keep native dtype in HBM (kernel upcasts); ravel/reshape are metadata-only.
    x = jnp.ravel(inp)
    t = jnp.ravel(target)

    # Small pad only when numel is not lane-aligned (common case: no copy).
    pad = (-n) % _LANE
    if pad:
        x = jnp.pad(x, (0, pad))
        t = jnp.pad(t, (0, pad))
    rows = (n + pad) // _LANE

    # Dtype-aware tile: ~_TARGET_TILE_BYTES of DMA per input per grid step,
    # so bf16 inputs get 2x the rows and the per-step byte count stays constant.
    itemsize = jnp.dtype(inp.dtype).itemsize
    max_block_rows = max(_ACC_ROWS, _TARGET_TILE_BYTES // (_LANE * itemsize))
    max_block_rows -= max_block_rows % _ACC_ROWS
    block_rows = min(max_block_rows, pl.cdiv(rows, _SUBLANE) * _SUBLANE)
    # Wide accumulator when the block allows it; (8,128) fallback for tiny inputs.
    acc_rows = _ACC_ROWS if block_rows % _ACC_ROWS == 0 else _SUBLANE

    total_tiles = pl.cdiv(rows, block_rows)
    # No duplicate-tile DMA when there is only one tile (tiny inputs).
    num_splits = min(_NUM_CORE_SPLITS, total_tiles)
    tiles_per_core = pl.cdiv(total_tiles, num_splits)

    x2 = x.reshape(rows, _LANE)
    t2 = t.reshape(rows, _LANE)

    def in_map(c, i):
        # Clamp so no DMA window starts fully out of bounds; the kernel's row
        # mask zeroes any duplicated / out-of-range contribution.
        return (jnp.minimum(c * tiles_per_core + i, total_tiles - 1), 0)

    kernel = functools.partial(
        _loss_kernel,
        same_sign_weight=float(same_sign_weight),
        diff_sign_weight=float(diff_sign_weight),
        inv_count=1.0 / float(n),
        tiles_per_core=tiles_per_core,
        valid_rows=rows,
        block_rows=block_rows,
        acc_rows=acc_rows,
    )

    out_bytes = num_splits * acc_rows * _LANE * 4
    cost = pl.CostEstimate(
        flops=7 * n,
        transcendentals=0,
        bytes_accessed=2 * n * itemsize + out_bytes,
    )

    out = pl.pallas_call(
        kernel,
        out_shape=jax.ShapeDtypeStruct((num_splits * acc_rows, _LANE), jnp.float32),
        grid_spec=pltpu.PrefetchScalarGridSpec(
            num_scalar_prefetch=0,
            grid=(num_splits, tiles_per_core),
            in_specs=[
                pl.BlockSpec((block_rows, _LANE), in_map),
                pl.BlockSpec((block_rows, _LANE), in_map),
            ],
            out_specs=pl.BlockSpec((acc_rows, _LANE), lambda c, i: (c, 0)),
            scratch_shapes=[pltpu.VMEM((acc_rows, _LANE), jnp.float32)],
        ),
        compiler_params=pltpu.CompilerParams(
            dimension_semantics=("parallel", "arbitrary"),
            vmem_limit_bytes=_VMEM_LIMIT_BYTES,
        ),
        cost_estimate=cost,
    )(x2, t2)

    # Single tiny cross-lane reduce of the per-core partial slabs.
    return jnp.sum(out)


def _reference_loss(inp, target, ssw=0.5, dsw=2.0):
    sq_error = (inp - target) ** 2
    same_sign = inp * target >= 0
    weights = jnp.where(same_sign, ssw, dsw)
    return jnp.mean(weights * sq_error)


if __name__ == "__main__":
    key = jax.random.PRNGKey(0)
    k1, k2 = jax.random.split(key)
    # Small shape consistent with an NCHW conv-style tensor.
    x = jax.random.normal(k1, (2, 4, 16, 16), dtype=jnp.float32)
    t = jax.random.normal(k2, (2, 4, 16, 16), dtype=jnp.float32)

    loss = sign_sensitive_mse_loss(x, t)
    loss = jax.block_until_ready(loss)

    ref = _reference_loss(x, t)
    assert jnp.allclose(loss, ref, rtol=1e-5, atol=1e-6), (loss, ref)
    print("KERNEL_OK")
</pallas_src>

<mosaic_0001>
module attributes {stable_mosaic.version = 11 : i64} {
  func.func @_loss_kernel(%arg0: i32, %arg1: i32, %arg2: memref<16x128xf32, #tpu.memory_space<vmem>>, %arg3: memref<16x128xf32, #tpu.memory_space<vmem>>, %arg4: memref<8x128xf32, #tpu.memory_space<vmem>>, %arg5: memref<8x128xf32, #tpu.memory_space<vmem>>) attributes {dimension_semantics = [#tpu.dimension_semantics<parallel>, #tpu.dimension_semantics<arbitrary>], iteration_bounds = array<i64: 1, 1>, scalar_prefetch = 0 : i64, scratch_operands = 1 : i64, tpu.core_type = #tpu.core_type<tc>, window_params = [{transform_indices = @transform_0, window_bounds = array<i64: 16, 128>}, {transform_indices = @transform_1, window_bounds = array<i64: 16, 128>}, {transform_indices = @transform_2, window_bounds = array<i64: 8, 128>}]} {
    %c0_i32 = arith.constant 0 : i32
    %0 = arith.cmpi eq, %arg1, %c0_i32 : i32
    %1 = arith.extui %0 : i1 to i32
    %c0_i32_0 = arith.constant 0 : i32
    %2 = arith.cmpi ne, %1, %c0_i32_0 : i32
    scf.if %2 {
      %cst = arith.constant 0.000000e+00 : f32
      %16 = vector.broadcast %cst : f32 to vector<8x128xf32>
      %c0 = arith.constant 0 : index
      %c0_7 = arith.constant 0 : index
      %17 = vector.load %arg5[%c0, %c0_7] : memref<8x128xf32, #tpu.memory_space<vmem>>, vector<8x128xf32>
      tpu.vector_store %arg5[%c0, %c0_7], %16 {strides = array<i32>} : memref<8x128xf32, #tpu.memory_space<vmem>>, vector<8x128xf32>,
    } else {
    }
    %c1_i32 = arith.constant 1 : i32
    %3 = arith.muli %arg0, %c1_i32 : i32
    %4 = arith.addi %3, %arg1 : i32
    %c16_i32 = arith.constant 16 : i32
    %5 = arith.muli %4, %c16_i32 : i32
    %c16_i32_1 = arith.constant 16 : i32
    %6 = arith.addi %5, %c16_i32_1 : i32
    %c16_i32_2 = arith.constant 16 : i32
    %7 = arith.cmpi sle, %6, %c16_i32_2 : i32
    %8 = arith.extui %7 : i1 to i32
    %c0_i32_3 = arith.constant 0 : i32
    %9 = arith.cmpi ne, %8, %c0_i32_3 : i32
    scf.if %9 {
      %c0 = arith.constant 0 : index
      %c0_7 = arith.constant 0 : index
      %16 = vector.load %arg2[%c0, %c0_7] : memref<16x128xf32, #tpu.memory_space<vmem>>, vector<16x128xf32>
      %c0_8 = arith.constant 0 : index
      %c0_9 = arith.constant 0 : index
      %17 = vector.load %arg3[%c0_8, %c0_9] : memref<16x128xf32, #tpu.memory_space<vmem>>, vector<16x128xf32>
      %18 = arith.subf %16, %17 : vector<16x128xf32>
      %19 = arith.subf %16, %17 : vector<16x128xf32>
      %20 = arith.mulf %18, %19 : vector<16x128xf32>
      %21 = arith.mulf %16, %17 : vector<16x128xf32>
      %cst = arith.constant 0.000000e+00 : f32
      %22 = vector.broadcast %cst : f32 to vector<16x128xf32>
      %23 = arith.cmpf oge, %21, %22 : vector<16x128xf32>
      %cst_10 = arith.constant 5.000000e-01 : f32
      %cst_11 = arith.constant 2.000000e+00 : f32
      %24 = vector.broadcast %cst_10 : f32 to vector<16x128xf32>
      %25 = vector.broadcast %cst_11 : f32 to vector<16x128xf32>
      %26 = arith.select %23, %24, %25 : vector<16x128xi1>, vector<16x128xf32>
      %27 = arith.mulf %26, %20 : vector<16x128xf32>
      %c0_12 = arith.constant 0 : index
      %c0_13 = arith.constant 0 : index
      %28 = vector.load %arg5[%c0_12, %c0_13] : memref<8x128xf32, #tpu.memory_space<vmem>>, vector<8x128xf32>
      %29 = vector.shape_cast %27 : vector<16x128xf32> to vector<2x8x128xf32>
      %cst_14 = arith.constant dense<0.000000e+00> : vector<8x128xf32>
      %30 = vector.multi_reduction <add>, %29, %cst_14 [0] : vector<2x8x128xf32> to vector<8x128xf32>
      %31 = arith.addf %28, %30 : vector<8x128xf32>
      %c0_15 = arith.constant 0 : index
      %c0_16 = arith.constant 0 : index
      %32 = vector.load %arg5[%c0_15, %c0_16] : memref<8x128xf32, #tpu.memory_space<vmem>>, vector<8x128xf32>
      tpu.vector_store %arg5[%c0_15, %c0_16], %31 {strides = array<i32>} : memref<8x128xf32, #tpu.memory_space<vmem>>, vector<8x128xf32>,
    } else {
    }
    %true = arith.constant true
    %10 = arith.xori %7, %true : i1
    %11 = arith.extui %10 : i1 to i32
    %c0_i32_4 = arith.constant 0 : i32
    %12 = arith.cmpi ne, %11, %c0_i32_4 : i32
    scf.if %12 {
      %c0 = arith.constant 0 : index
      %c0_7 = arith.constant 0 : index
      %16 = vector.load %arg2[%c0, %c0_7] : memref<16x128xf32, #tpu.memory_space<vmem>>, vector<16x128xf32>
      %c0_8 = arith.constant 0 : index
      %c0_9 = arith.constant 0 : index
      %17 = vector.load %arg3[%c0_8, %c0_9] : memref<16x128xf32, #tpu.memory_space<vmem>>, vector<16x128xf32>
      %18 = arith.subf %16, %17 : vector<16x128xf32>
      %19 = arith.subf %16, %17 : vector<16x128xf32>
      %20 = arith.mulf %18, %19 : vector<16x128xf32>
      %21 = arith.mulf %16, %17 : vector<16x128xf32>
      %cst = arith.constant 0.000000e+00 : f32
      %22 = vector.broadcast %cst : f32 to vector<16x128xf32>
      %23 = arith.cmpf oge, %21, %22 : vector<16x128xf32>
      %cst_10 = arith.constant 5.000000e-01 : f32
      %cst_11 = arith.constant 2.000000e+00 : f32
      %24 = vector.broadcast %cst_10 : f32 to vector<16x128xf32>
      %25 = vector.broadcast %cst_11 : f32 to vector<16x128xf32>
      %26 = arith.select %23, %24, %25 : vector<16x128xi1>, vector<16x128xf32>
      %27 = arith.mulf %26, %20 : vector<16x128xf32>
      %28 = tpu.iota {dimensions = array<i32: 0>} : vector<16x128xi32>
      %29 = vector.broadcast %5 : i32 to vector<16x128xi32>
      %30 = arith.addi %28, %29 : vector<16x128xi32>
      %c16_i32_12 = arith.constant 16 : i32
      %31 = vector.broadcast %c16_i32_12 : i32 to vector<16x128xi32>
      %32 = arith.cmpi slt, %30, %31 : vector<16x128xi32>
      %cst_13 = arith.constant 0.000000e+00 : f32
      %33 = vector.broadcast %cst_13 : f32 to vector<16x128xf32>
      %34 = arith.select %32, %27, %33 : vector<16x128xi1>, vector<16x128xf32>
      %c0_14 = arith.constant 0 : index
      %c0_15 = arith.constant 0 : index
      %35 = vector.load %arg5[%c0_14, %c0_15] : memref<8x128xf32, #tpu.memory_space<vmem>>, vector<8x128xf32>
      %36 = vector.shape_cast %34 : vector<16x128xf32> to vector<2x8x128xf32>
      %cst_16 = arith.constant dense<0.000000e+00> : vector<8x128xf32>
      %37 = vector.multi_reduction <add>, %36, %cst_16 [0] : vector<2x8x128xf32> to vector<8x128xf32>
      %38 = arith.addf %35, %37 : vector<8x128xf32>
      %c0_17 = arith.constant 0 : index
      %c0_18 = arith.constant 0 : index
      %39 = vector.load %arg5[%c0_17, %c0_18] : memref<8x128xf32, #tpu.memory_space<vmem>>, vector<8x128xf32>
      tpu.vector_store %arg5[%c0_17, %c0_18], %38 {strides = array<i32>} : memref<8x128xf32, #tpu.memory_space<vmem>>, vector<8x128xf32>,
    } else {
    }
    %c0_i32_5 = arith.constant 0 : i32
    %13 = arith.cmpi eq, %arg1, %c0_i32_5 : i32
    %14 = arith.extui %13 : i1 to i32
    %c0_i32_6 = arith.constant 0 : i32
    %15 = arith.cmpi ne, %14, %c0_i32_6 : i32
    scf.if %15 {
      %c0 = arith.constant 0 : index
      %c0_7 = arith.constant 0 : index
      %16 = vector.load %arg5[%c0, %c0_7] : memref<8x128xf32, #tpu.memory_space<vmem>>, vector<8x128xf32>
      %cst = arith.constant 4.8828125E-4 : f32
      %17 = vector.broadcast %cst : f32 to vector<8x128xf32>
      %18 = arith.mulf %16, %17 : vector<8x128xf32>
      %c0_8 = arith.constant 0 : index
      %c0_9 = arith.constant 0 : index
      %19 = vector.load %arg4[%c0_8, %c0_9] : memref<8x128xf32, #tpu.memory_space<vmem>>, vector<8x128xf32>
      tpu.vector_store %arg4[%c0_8, %c0_9], %18 {strides = array<i32>} : memref<8x128xf32, #tpu.memory_space<vmem>>, vector<8x128xf32>,
    } else {
    }
    return
  }
  func.func @transform_0(%arg0: i32, %arg1: i32) -> (i32, i32) {
    %c1_i32 = arith.constant 1 : i32
    %0 = arith.muli %arg0, %c1_i32 : i32
    %1 = arith.addi %0, %arg1 : i32
    %c0_i32 = arith.constant 0 : i32
    %2 = arith.minsi %1, %c0_i32 : i32
    %c0_i32_0 = arith.constant 0 : i32
    %c0_i32_1 = arith.constant 0 : i32
    return %2, %c0_i32_0 : i32, i32
  }
  func.func @transform_1(%arg0: i32, %arg1: i32) -> (i32, i32) {
    %c1_i32 = arith.constant 1 : i32
    %0 = arith.muli %arg0, %c1_i32 : i32
    %1 = arith.addi %0, %arg1 : i32
    %c0_i32 = arith.constant 0 : i32
    %2 = arith.minsi %1, %c0_i32 : i32
    %c0_i32_0 = arith.constant 0 : i32
    %c0_i32_1 = arith.constant 0 : i32
    return %2, %c0_i32_0 : i32, i32
  }
  func.func @transform_2(%arg0: i32, %arg1: i32) -> (i32, i32) {
    %c0_i32 = arith.constant 0 : i32
    %c0_i32_0 = arith.constant 0 : i32
    return %arg0, %c0_i32 : i32, i32
  }
}

</mosaic_0001>

<llo_original>
// kernel: tpu_custom_call.1
$region0: #{tpu_custom_call.1}
  #allocation0 [shape = 'u32[]', space=smem, size = 0x4, offset = 0x4, fixed_abs, tag = 'smem constant byte address 0x4 - core index']
  #allocation1 [shape = 'u32[144,128]{1,0:T(1,128)}', space=vmem, size = 0x12000, scoped, tag = 'internal scratch']
  #allocation2 [shape = 'f32[8,128]{1,0:T(8,128)}', space=vmem, size = 0x1000, scoped, tag = 'scratch operand']
  %s0 = inlined_call_operand.hbm [shape: f32[16,128], index: 0, kind: input, shape index: {}]
  %s1 = inlined_call_operand.hbm [shape: f32[16,128], index: 1, kind: input, shape index: {}]
  %s2 = inlined_call_operand.hbm [shape: f32[8,128], index: 2, kind: output, shape index: {}]
  %s3 = sld [smem:[#allocation0]]
  $region42: #{tpu_custom_call.1} parent=0
    _
  %s5 = ssub.s32 1, %s3
  %s6 = scalar_select 0, %s5, %s3
  $region1: #{tpu_custom_call.1} parent=0
    #allocation3 [shape = 'u8[8192]{0}', space=vmem, size = 0x2000, scoped, tag = 'input window, operand 0, single buffered']
    #allocation4 [shape = 's32[1]{0}', space=sflag, size = 0x4, scoped, tag = 'scoped memory for tpu_custom_call.1']
    #allocation5 [shape = 's32[1]{0}', space=sflag, size = 0x4, scoped, tag = 'scoped memory for tpu_custom_call.1']
    #allocation6 [shape = 'u8[8192]{0}', space=vmem, size = 0x2000, scoped, tag = 'input window, operand 1, single buffered']
    #allocation7 [shape = 's32[1]{0}', space=sflag, size = 0x4, scoped, tag = 'scoped memory for tpu_custom_call.1']
    #allocation8 [shape = 'u8[4096]{0}', space=vmem, size = 0x1000, scoped, tag = 'output window, operand 0, single buffered']
    %7 = vsyncpa [#allocation4], 0
    %8 = vsyncpa [#allocation7], 0
    %9 = vsyncpa [#allocation5], 0
    // Predicated region
    $region2: #{tpu_custom_call.1} parent=1 // pred_check
      _
    $region3: #{tpu_custom_call.1} parent=1 // pred_check_branch
      %11 = sbr.rel (0) target = $region5
    $region4: #{tpu_custom_call.1} parent=1 // pred_region
      %s12 = sadd.s32 0, 0
      %p13 = scmp.lt.s32.totalorder %s12, 0
      %s14 = scalar_select %p13, %s12, 0
      %s15 = smul.u32 2, %s14
      %s17 = ssub.s32 256, 256
      %18 = vsyncadd [#allocation4], %s17
      %s19 = smul.addr %s15, 128
      %s20 = scalar_lea.hbm %s0, %s19
      %s21 = sshll.u32 [#allocation3], 4
      %s22 = int_to_ptr.vmem [resolvable:$true] %s21
      %27 = dma.hbm_to_vmem [thread:$0]  %s20, 256, %s22, [#allocation4], 128, 128, 8
    $region5: #{tpu_custom_call.1} parent=1 // pred_fallthru
      _
    // Predicated region
    $region6: #{tpu_custom_call.1} parent=1 // pred_check
      _
    $region7: #{tpu_custom_call.1} parent=1 // pred_check_branch
      %29 = sbr.rel (0) target = $region9
    $region8: #{tpu_custom_call.1} parent=1 // pred_region
      %s30 = sadd.s32 0, 0
      %p31 = scmp.lt.s32.totalorder %s30, 0
      %s32 = scalar_select %p31, %s30, 0
      %s33 = smul.u32 2, %s32
      %s35 = ssub.s32 256, 256
      %36 = vsyncadd [#allocation7], %s35
      %s37 = smul.addr %s33, 128
      %s38 = scalar_lea.hbm %s1, %s37
      %s39 = sshll.u32 [#allocation6], 4
      %s40 = int_to_ptr.vmem [resolvable:$true] %s39
      %45 = dma.hbm_to_vmem [thread:$0]  %s38, 256, %s40, [#allocation7], 128, 128, 8
    $region9: #{tpu_custom_call.1} parent=1 // pred_fallthru
      _
    // Predicated region
    $region10: #{tpu_custom_call.1} parent=1 // pred_check
      _
    $region11: #{tpu_custom_call.1} parent=1 // pred_check_branch
      %47 = sbr.rel (0) target = $region13
    $region12: #{tpu_custom_call.1} parent=1 // pred_region
      %48 = dma.done [#allocation4], 256
    $region13: #{tpu_custom_call.1} parent=1 // pred_fallthru
      _
    // Predicated region
    $region14: #{tpu_custom_call.1} parent=1 // pred_check
      _
    $region15: #{tpu_custom_call.1} parent=1 // pred_check_branch
      %50 = sbr.rel (0) target = $region17
    $region16: #{tpu_custom_call.1} parent=1 // pred_region
      %51 = dma.done [#allocation7], 256
    $region17: #{tpu_custom_call.1} parent=1 // pred_fallthru
      _
    %s52 = sadd.s32 0, 0
    %p53 = scmp.lt.s32.totalorder %s52, 0
    %s54 = scalar_select %p53, %s52, 0
    %s55 = smul.u32 2, %s54
    %s56 = sadd.s32 0, 0
    %p57 = scmp.lt.s32.totalorder %s56, 0
    %s58 = scalar_select %p57, %s56, 0
    %s59 = smul.u32 2, %s58
    %p60 = scmp.eq.s32.totalorder 0, 0
    // Predicated region
    $region18: #{tpu_custom_call.1} parent=1 // pred_check
      %p61 = pneg %p60
    $region19: #{tpu_custom_call.1} parent=1 // pred_check_branch
      %63 = sbr.rel (%p61) target = $region21
    $region20: #{tpu_custom_call.1} parent=1 // pred_region
      %64 = vst [vmem:[#allocation2] sm:$0xff] 0.0
    $region21: #{tpu_custom_call.1} parent=1 // pred_fallthru
      _
    %s65 = sadd.s32 0, 0
    %s66 = smul.u32 %s65, 16
    %s67 = sadd.s32 %s66, 16
    %p68 = scmp.le.s32.totalorder %s67, 16
    // Predicated region
    $region22: #{tpu_custom_call.1} parent=1 // pred_check
      %p69 = pneg %p68
    $region23: #{tpu_custom_call.1} parent=1 // pred_check_branch
      %71 = sbr.rel (%p69) target = $region25
    $region24: #{tpu_custom_call.1} parent=1 // pred_region
      %v72 = vld [vmem:[#allocation3] sm:$0xff]
      %v73 = vld [vmem:[#allocation3 + $0x8] sm:$0xff]
      %v74 = vld [vmem:[#allocation6] sm:$0xff]
      %v75 = vld [vmem:[#allocation6 + $0x8] sm:$0xff]
      %v76 = vsub.f32 %v72, %v74
      %v77 = vsub.f32 %v73, %v75
      %v78 = vmul.f32 %v76, %v76
      %v79 = vmul.f32 %v77, %v77
      %v80 = vmul.f32 %v72, %v74
      %v81 = vmul.f32 %v73, %v75
      %vm82 = vcmp.ge.f32.partialorder %v80, 0.0
      %vm83 = vcmp.ge.f32.partialorder %v81, 0.0
      %v84 = vsel %vm82, 0.5, 2.0
      %v85 = vsel %vm83, 0.5, 2.0
      %v86 = vmul.f32 %v84, %v78
      %v87 = vmul.f32 %v85, %v79
      %v88 = vld [vmem:[#allocation2] sm:$0xff]
      %v89 = vadd.f32 %v86, %v87
      %v90 = vadd.f32 %v88, %v89
      %91 = vst [vmem:[#allocation2] sm:$0xff] %v90
    $region25: #{tpu_custom_call.1} parent=1 // pred_fallthru
      _
    %p92 = scmp.gt.s32.totalorder %s67, 16
    // Predicated region
    $region26: #{tpu_custom_call.1} parent=1 // pred_check
      %p93 = pneg %p92
    $region27: #{tpu_custom_call.1} parent=1 // pred_check_branch
      %95 = sbr.rel (%p93) target = $region29
    $region28: #{tpu_custom_call.1} parent=1 // pred_region
      %v96 = vld [vmem:[#allocation3] sm:$0xff]
      %v97 = vld [vmem:[#allocation3 + $0x8] sm:$0xff]
      %v98 = vld [vmem:[#allocation6] sm:$0xff]
      %v99 = vld [vmem:[#allocation6 + $0x8] sm:$0xff]
      %v100 = vsub.f32 %v96, %v98
      %v101 = vsub.f32 %v97, %v99
      %v102 = vmul.f32 %v100, %v100
      %v103 = vmul.f32 %v101, %v101
      %v104 = vmul.f32 %v96, %v98
      %v105 = vmul.f32 %v97, %v99
      %vm106 = vcmp.ge.f32.partialorder %v104, 0.0
      %vm107 = vcmp.ge.f32.partialorder %v105, 0.0
      %v108 = vsel %vm106, 0.5, 2.0
      %v109 = vsel %vm107, 0.5, 2.0
      %v110 = vmul.f32 %v108, %v102
      %v111 = vmul.f32 %v109, %v103
      %v112 = vlaneseq
      %v113 = vshrl.u32 %v112, 7
      %v114 = vadd.s32 %v113, 8
      %v115 = vstv %s66
      %v116 = vadd.s32 %v113, %v115
      %v117 = vadd.s32 %v114, %v115
      %vm118 = vcmp.lt.s32.totalorder %v116, 16
      %vm119 = vcmp.lt.s32.totalorder %v117, 16
      %v120 = vsel %vm118, %v110, 0.0
      %v121 = vsel %vm119, %v111, 0.0
      %v122 = vld [vmem:[#allocation2] sm:$0xff]
      %v123 = vadd.f32 %v120, %v121
      %v124 = vadd.f32 %v122, %v123
      %125 = vst [vmem:[#allocation2] sm:$0xff] %v124
    $region29: #{tpu_custom_call.1} parent=1 // pred_fallthru
      _
    // Predicated region
    $region30: #{tpu_custom_call.1} parent=1 // pred_check
      %p126 = pneg %p60
    $region31: #{tpu_custom_call.1} parent=1 // pred_check_branch
      %128 = sbr.rel (%p126) target = $region33
    $region32: #{tpu_custom_call.1} parent=1 // pred_region
      %v129 = vld [vmem:[#allocation2] sm:$0xff]
      %v130 = vmul.f32 %v129, 0.00048828125
      %131 = vst [vmem:[#allocation8] sm:$0xff] %v130
    $region33: #{tpu_custom_call.1} parent=1 // pred_fallthru
      _
    // Predicated region
    $region34: #{tpu_custom_call.1} parent=1 // pred_check
      _
    $region35: #{tpu_custom_call.1} parent=1 // pred_check_branch
      %133 = sbr.rel (0) target = $region37
    $region36: #{tpu_custom_call.1} parent=1 // pred_region
      %s135 = ssub.s32 128, 128
      %136 = vsyncadd [#allocation5], %s135
      %s138 = sshll.u32 [#allocation8], 4
      %s139 = int_to_ptr.vmem [resolvable:$true] %s138
      %141 = dma.vmem_to_hbm [thread:$0]  %s139, 128, %s2, [#allocation5]
    $region37: #{tpu_custom_call.1} parent=1 // pred_fallthru
      _
    // Predicated region
    $region38: #{tpu_custom_call.1} parent=1 // pred_check
      _
    $region39: #{tpu_custom_call.1} parent=1 // pred_check_branch
      %143 = sbr.rel (0) target = $region41
    $region40: #{tpu_custom_call.1} parent=1 // pred_region
      %144 = dma.done [#allocation5], 128
    $region41: #{tpu_custom_call.1} parent=1 // pred_fallthru
      _
    %145 = vsyncpa [#allocation4], 1
    %146 = vsyncpa [#allocation7], 1
    %147 = vsyncpa [#allocation5], 1

</llo_original>
